<compile_context>
chip_gen: v5e
topology: v5e:2x2
jax: 0.10.0
libtpu: 0.0.40
codegen_flags: <defaults>
</compile_context>

<pallas_src>
import functools

import jax
import jax.numpy as jnp
from jax.experimental import pallas as pl
from jax.experimental.pallas import tpu as pltpu

_EPS = 1e-5


# ----------------------------- parameter packing -----------------------------

def _round8(n):
    return ((n + 7) // 8) * 8


def _vec_layout(c_in, c_out):
    """Per-channel vectors packed into one (total, 1) slab, 8-row-aligned segments."""
    entries = [("s1", c_in), ("t1", c_in), ("b1", c_out), ("b2", c_out),
               ("s3", c_in + c_out), ("t3", c_in + c_out),
               ("b3", c_out), ("b4", c_out)]
    layout, off = {}, 0
    for name, size in entries:
        layout[name] = (off, size)
        off += _round8(size)
    return layout, off


def _w_layout(c_in, c_out):
    """All conv weight matrices packed into one slab, 8-row-aligned segments."""
    cols = c_in + c_out
    entries = [("w1", c_out, c_in),            # layer1 k=1 conv (BN2 folded in)
               ("w3", c_out, c_in + c_out),    # layer2 k=1 conv (BN4 folded in)
               ("w2", 3 * c_out, c_out),       # layer1 k=3 conv, taps stacked on rows
               ("w4", 3 * c_out, c_out)]       # layer2 k=3 conv, taps stacked on rows
    layout, off = {}, 0
    for name, rows, ccols in entries:
        layout[name] = (off, rows, ccols)
        off += _round8(rows)
    return layout, off, cols


# ------------------------------- Pallas kernel --------------------------------

def _make_kernel(c_in, c_out):
    c_mid = c_in + c_out
    v_lay, _ = _vec_layout(c_in, c_out)
    w_lay, _, _ = _w_layout(c_in, c_out)

    def kernel(x_ref, vec_ref, w_ref, out_ref):
        def vec(name):                       # (size, 1) column, broadcasts along L
            off, size = v_lay[name]
            return vec_ref[off:off + size, :]

        def mat(name):
            off, rows, cols = w_lay[name]
            return w_ref[off:off + rows, 0:cols]

        def conv3(h, wp, b):
            # One packed MXU matmul for all three taps: (3*c_out, c_out) @ (c_out, L).
            y = jnp.dot(wp, h, preferred_element_type=jnp.float32)
            y_l = y[0:c_out]                 # tap k=0 -> uses h[:, l-1]
            y_c = y[c_out:2 * c_out]         # tap k=1 -> uses h[:, l]
            y_r = y[2 * c_out:3 * c_out]     # tap k=2 -> uses h[:, l+1]
            zero = jnp.zeros((c_out, 1), jnp.float32)
            # Shift the small outputs along the length (lane) axis, zero at the edges.
            # (pltpu.roll + iota mask is the XLU alternative; explicit slice+concat of
            #  a single lane keeps semantics unambiguous at this size.)
            left = jnp.concatenate([zero, y_l[:, :-1]], axis=1)   # y_l shifted right
            right = jnp.concatenate([y_r[:, 1:], zero], axis=1)   # y_r shifted left
            return left + y_c + right + b

        x = x_ref[...]                                           # (c_in, L)

        # ---- layer1: BN1 -> ReLU -> Conv k=1 (BN2 folded) -> ReLU -> Conv k=3 ----
        h1 = jnp.maximum(x * vec("s1") + vec("t1"), 0.0)
        h2 = jnp.maximum(
            jnp.dot(mat("w1"), h1, preferred_element_type=jnp.float32) + vec("b1"),
            0.0)
        lay1 = conv3(h2, mat("w2"), vec("b2"))                   # (c_out, L)

        # ---- layer2 on concat([x, lay1]) along channels (sublanes) ----
        x1 = jnp.concatenate([x, lay1], axis=0)                  # (c_mid, L)
        h3 = jnp.maximum(x1 * vec("s3") + vec("t3"), 0.0)
        h4 = jnp.maximum(
            jnp.dot(mat("w3"), h3, preferred_element_type=jnp.float32) + vec("b3"),
            0.0)
        lay2 = conv3(h4, mat("w4"), vec("b4"))                   # (c_out, L)

        # Single full-tile store of the dense concat output.
        out_ref[...] = jnp.concatenate([x1, lay2], axis=0)       # (c_in + 2*c_out, L)

    return kernel


# --------------------------- raw parameter utilities --------------------------

def _bn_params(key, c):
    k1, k2, k3, k4 = jax.random.split(key, 4)
    gamma = 1.0 + 0.1 * jax.random.normal(k1, (c,), jnp.float32)
    beta = 0.1 * jax.random.normal(k2, (c,), jnp.float32)
    mean = 0.1 * jax.random.normal(k3, (c,), jnp.float32)
    var = 1.0 + 0.1 * jnp.abs(jax.random.normal(k4, (c,), jnp.float32))
    return gamma, beta, mean, var


def _conv_params(key, c_out, c_in, k):
    kw, kb = jax.random.split(key)
    w = 0.1 * jax.random.normal(kw, (c_out, c_in, k), jnp.float32)  # PyTorch (O, I, K)
    b = 0.1 * jax.random.normal(kb, (c_out,), jnp.float32)
    return w, b


def make_raw_params(key, in_features, out_features):
    keys = jax.random.split(key, 8)
    c1 = in_features + out_features
    return {
        "layer1": {
            "bn_a": _bn_params(keys[0], in_features),
            "conv_a": _conv_params(keys[1], out_features, in_features, 1),
            "bn_b": _bn_params(keys[2], out_features),
            "conv_b": _conv_params(keys[3], out_features, out_features, 3),
        },
        "layer2": {
            "bn_a": _bn_params(keys[4], c1),
            "conv_a": _conv_params(keys[5], out_features, c1, 1),
            "bn_b": _bn_params(keys[6], out_features),
            "conv_b": _conv_params(keys[7], out_features, out_features, 3),
        },
    }


def _fold_bn(gamma, beta, mean, var):
    scale = gamma / jnp.sqrt(var + _EPS)
    shift = beta - mean * scale
    return scale, shift


def fold_kernel_params(raw, in_features, out_features):
    """Fold BN to scale/shift (and into the k=1 convs), pack everything into 2 slabs."""
    c_in, c_out = in_features, out_features
    l1, l2 = raw["layer1"], raw["layer2"]

    # layer1
    s1, t1 = _fold_bn(*l1["bn_a"])
    w1 = l1["conv_a"][0][:, :, 0]                      # (c_out, c_in)
    b1 = l1["conv_a"][1]
    s2, t2 = _fold_bn(*l1["bn_b"])
    w1f = s2[:, None] * w1                             # BN2 folded into conv_a
    b1f = s2 * b1 + t2
    w2 = l1["conv_b"][0]                               # (c_out, c_out, 3)
    w2p = jnp.concatenate([w2[:, :, 0], w2[:, :, 1], w2[:, :, 2]], axis=0)
    b2 = l1["conv_b"][1]

    # layer2
    s3, t3 = _fold_bn(*l2["bn_a"])                     # over c_in + c_out channels
    w3 = l2["conv_a"][0][:, :, 0]                      # (c_out, c_in + c_out)
    b3 = l2["conv_a"][1]
    s4, t4 = _fold_bn(*l2["bn_b"])
    w3f = s4[:, None] * w3                             # BN4 folded into conv_a
    b3f = s4 * b3 + t4
    w4 = l2["conv_b"][0]
    w4p = jnp.concatenate([w4[:, :, 0], w4[:, :, 1], w4[:, :, 2]], axis=0)
    b4 = l2["conv_b"][1]

    # pack per-channel vectors into one (V, 1) slab
    v_lay, v_total = _vec_layout(c_in, c_out)
    vecs = {"s1": s1, "t1": t1, "b1": b1f, "b2": b2,
            "s3": s3, "t3": t3, "b3": b3f, "b4": b4}
    vec_slab = jnp.zeros((v_total, 1), jnp.float32)
    for name, (off, size) in v_lay.items():
        vec_slab = vec_slab.at[off:off + size, 0].set(vecs[name])

    # pack all conv weights into one (R, C) slab
    w_lay, w_total, w_cols = _w_layout(c_in, c_out)
    mats = {"w1": w1f, "w3": w3f, "w2": w2p, "w4": w4p}
    w_slab = jnp.zeros((w_total, w_cols), jnp.float32)
    for name, (off, rows, cols) in w_lay.items():
        w_slab = w_slab.at[off:off + rows, :cols].set(mats[name])

    return vec_slab, w_slab


# ---------------------------------- wrapper -----------------------------------

@functools.partial(jax.jit, static_argnames=("in_features", "out_features"))
def blond_dense_forward(x_ncl, vec_slab, w_slab, *, in_features, out_features):
    """x_ncl: (N, C_in, L) float32 (PyTorch layout). Returns (N, C_in + 2*C_out, L)."""
    n, c_in, length = x_ncl.shape
    assert c_in == in_features
    c_out = out_features
    c_total = c_in + 2 * c_out

    kernel = _make_kernel(c_in, c_out)

    # One batch element per grid step (block covers the full C and L extents); the
    # grid stays "parallel" so v7x uses both TensorCores.  For larger real shapes,
    # process several batch elements per step and set vmem_limit_bytes explicitly.
    return pl.pallas_call(
        kernel,
        out_shape=jax.ShapeDtypeStruct((n, c_total, length), jnp.float32),
        grid=(n,),
        in_specs=[
            pl.BlockSpec((None, c_in, length), lambda b: (b, 0, 0)),
            pl.BlockSpec(vec_slab.shape, lambda b: (0, 0)),
            pl.BlockSpec(w_slab.shape, lambda b: (0, 0)),
        ],
        out_specs=pl.BlockSpec((None, c_total, length), lambda b: (b, 0, 0)),
        compiler_params=pltpu.CompilerParams(dimension_semantics=("parallel",)),
    )(x_ncl, vec_slab, w_slab)


# ----------------------------- pure-JAX reference ------------------------------

def _ref_forward(x_ncl, raw):
    def bn(x, g, b, m, v):
        return ((x - m[None, :, None]) / jnp.sqrt(v[None, :, None] + _EPS)
                * g[None, :, None] + b[None, :, None])

    def conv(x, w, b, pad):
        y = jax.lax.conv_general_dilated(
            x, w, window_strides=(1,), padding=[(pad, pad)],
            dimension_numbers=("NCH", "OIH", "NCH"))
        return y + b[None, :, None]

    def layer(x, p):
        h = jax.nn.relu(bn(x, *p["bn_a"]))
        h = conv(h, *p["conv_a"], 0)
        h = jax.nn.relu(bn(h, *p["bn_b"]))
        h = conv(h, *p["conv_b"], 1)
        return h

    lay1 = layer(x_ncl, raw["layer1"])
    x1 = jnp.concatenate([x_ncl, lay1], axis=1)
    lay2 = layer(x1, raw["layer2"])
    return jnp.concatenate([x_ncl, lay1, lay2], axis=1)


# ------------------------------------ main -------------------------------------

if __name__ == "__main__":
    in_features = 4
    out_features = 8
    batch = 2
    length = 128   # multiple of 128 so the length (lane) dimension is dense

    key = jax.random.PRNGKey(0)
    k_x, k_p = jax.random.split(key)
    x = jax.random.normal(k_x, (batch, in_features, length), jnp.float32)

    raw = make_raw_params(k_p, in_features, out_features)
    vec_slab, w_slab = fold_kernel_params(raw, in_features, out_features)

    out = blond_dense_forward(x, vec_slab, w_slab,
                              in_features=in_features, out_features=out_features)
    out = jax.block_until_ready(out)

    ref = jax.block_until_ready(_ref_forward(x, raw))
    assert out.shape == (batch, in_features + 2 * out_features, length)
    assert jnp.allclose(out, ref, rtol=1e-4, atol=1e-4), (
        f"max abs err = {jnp.max(jnp.abs(out - ref))}")

    print("KERNEL_OK")
</pallas_src>

<mosaic_0001>
module attributes {stable_mosaic.version = 11 : i64} {
  func.func @kernel(%arg0: i32, %arg1: memref<1x4x128xf32, #tpu.memory_space<vmem>>, %arg2: memref<80x1xf32, #tpu.memory_space<vmem>>, %arg3: memref<64x12xf32, #tpu.memory_space<vmem>>, %arg4: memref<1x20x128xf32, #tpu.memory_space<vmem>>) attributes {dimension_semantics = [#tpu.dimension_semantics<parallel>], iteration_bounds = array<i64: 2>, scalar_prefetch = 0 : i64, scratch_operands = 0 : i64, tpu.core_type = #tpu.core_type<tc>, window_params = [{transform_indices = @transform_0, window_bounds = array<i64: 1, 4, 128>}, {pipeline_mode = #tpu.pipeline_mode<synchronous>, transform_indices = @transform_1, window_bounds = array<i64: 80, 1>}, {pipeline_mode = #tpu.pipeline_mode<synchronous>, transform_indices = @transform_2, window_bounds = array<i64: 64, 12>}, {transform_indices = @transform_3, window_bounds = array<i64: 1, 20, 128>}]} {
    %c0 = arith.constant 0 : index
    %c0_0 = arith.constant 0 : index
    %c0_1 = arith.constant 0 : index
    %0 = vector.load %arg1[%c0, %c0_0, %c0_1] : memref<1x4x128xf32, #tpu.memory_space<vmem>>, vector<1x4x128xf32>
    %1 = vector.shape_cast %0 : vector<1x4x128xf32> to vector<4x128xf32>
    %c0_2 = arith.constant 0 : index
    %c0_3 = arith.constant 0 : index
    %2 = vector.load %arg2[%c0_2, %c0_3] : memref<80x1xf32, #tpu.memory_space<vmem>>, vector<4x1xf32>
    %3 = vector.broadcast %2 : vector<4x1xf32> to vector<4x128xf32>
    %4 = arith.mulf %1, %3 : vector<4x128xf32>
    %c8 = arith.constant 8 : index
    %c0_4 = arith.constant 0 : index
    %5 = vector.load %arg2[%c8, %c0_4] : memref<80x1xf32, #tpu.memory_space<vmem>>, vector<4x1xf32>
    %6 = vector.broadcast %5 : vector<4x1xf32> to vector<4x128xf32>
    %7 = arith.addf %4, %6 : vector<4x128xf32>
    %cst = arith.constant 0.000000e+00 : f32
    %8 = vector.broadcast %cst : f32 to vector<4x128xf32>
    %9 = arith.maximumf %7, %8 : vector<4x128xf32>
    %c0_5 = arith.constant 0 : index
    %c0_6 = arith.constant 0 : index
    %10 = vector.load %arg3[%c0_5, %c0_6] : memref<64x12xf32, #tpu.memory_space<vmem>>, vector<8x4xf32>
    %cst_7 = arith.constant dense<0.000000e+00> : vector<8x128xf32>
    %11 = tpu.matmul %10, %9, %cst_7 {dimension_numbers = #tpu.dot_dimension_numbers<[1], [0], [0], [1], [0, 0, 1, 1], [], []>} : vector<8x4xf32>, vector<4x128xf32>, vector<8x128xf32> -> vector<8x128xf32>
    %c16 = arith.constant 16 : index
    %c0_8 = arith.constant 0 : index
    %12 = vector.load %arg2[%c16, %c0_8] : memref<80x1xf32, #tpu.memory_space<vmem>>, vector<8x1xf32>
    %13 = vector.broadcast %12 : vector<8x1xf32> to vector<8x128xf32>
    %14 = arith.addf %11, %13 : vector<8x128xf32>
    %cst_9 = arith.constant 0.000000e+00 : f32
    %15 = vector.broadcast %cst_9 : f32 to vector<8x128xf32>
    %16 = arith.maximumf %14, %15 : vector<8x128xf32>
    %c16_10 = arith.constant 16 : index
    %c0_11 = arith.constant 0 : index
    %17 = vector.load %arg3[%c16_10, %c0_11] : memref<64x12xf32, #tpu.memory_space<vmem>>, vector<24x8xf32>
    %c24 = arith.constant 24 : index
    %c0_12 = arith.constant 0 : index
    %18 = vector.load %arg2[%c24, %c0_12] : memref<80x1xf32, #tpu.memory_space<vmem>>, vector<8x1xf32>
    %cst_13 = arith.constant dense<0.000000e+00> : vector<24x128xf32>
    %19 = tpu.matmul %17, %16, %cst_13 {dimension_numbers = #tpu.dot_dimension_numbers<[1], [0], [0], [1], [0, 0, 1, 1], [], []>} : vector<24x8xf32>, vector<8x128xf32>, vector<24x128xf32> -> vector<24x128xf32>
    %20 = vector.extract_strided_slice %19 {offsets = [0, 0], sizes = [8, 128], strides = [1, 1]} : vector<24x128xf32> to vector<8x128xf32>
    %21 = vector.extract_strided_slice %19 {offsets = [8, 0], sizes = [8, 128], strides = [1, 1]} : vector<24x128xf32> to vector<8x128xf32>
    %22 = vector.extract_strided_slice %19 {offsets = [16, 0], sizes = [8, 128], strides = [1, 1]} : vector<24x128xf32> to vector<8x128xf32>
    %cst_14 = arith.constant 0.000000e+00 : f32
    %23 = vector.broadcast %cst_14 : f32 to vector<8x1xf32>
    %24 = vector.extract_strided_slice %20 {offsets = [0, 0], sizes = [8, 127], strides = [1, 1]} : vector<8x128xf32> to vector<8x127xf32>
    %25 = tpu.concatenate %23, %24 in 1 : vector<8x1xf32>, vector<8x127xf32> -> vector<8x128xf32>
    %26 = vector.extract_strided_slice %22 {offsets = [0, 1], sizes = [8, 127], strides = [1, 1]} : vector<8x128xf32> to vector<8x127xf32>
    %27 = tpu.concatenate %26, %23 in 1 : vector<8x127xf32>, vector<8x1xf32> -> vector<8x128xf32>
    %28 = arith.addf %25, %21 : vector<8x128xf32>
    %29 = arith.addf %28, %27 : vector<8x128xf32>
    %30 = vector.broadcast %18 : vector<8x1xf32> to vector<8x128xf32>
    %31 = arith.addf %29, %30 : vector<8x128xf32>
    %32 = tpu.concatenate %1, %31 in 0 : vector<4x128xf32>, vector<8x128xf32> -> vector<12x128xf32>
    %c32 = arith.constant 32 : index
    %c0_15 = arith.constant 0 : index
    %33 = vector.load %arg2[%c32, %c0_15] : memref<80x1xf32, #tpu.memory_space<vmem>>, vector<12x1xf32>
    %34 = vector.broadcast %33 : vector<12x1xf32> to vector<12x128xf32>
    %35 = arith.mulf %32, %34 : vector<12x128xf32>
    %c48 = arith.constant 48 : index
    %c0_16 = arith.constant 0 : index
    %36 = vector.load %arg2[%c48, %c0_16] : memref<80x1xf32, #tpu.memory_space<vmem>>, vector<12x1xf32>
    %37 = vector.broadcast %36 : vector<12x1xf32> to vector<12x128xf32>
    %38 = arith.addf %35, %37 : vector<12x128xf32>
    %cst_17 = arith.constant 0.000000e+00 : f32
    %39 = vector.broadcast %cst_17 : f32 to vector<12x128xf32>
    %40 = arith.maximumf %38, %39 : vector<12x128xf32>
    %c8_18 = arith.constant 8 : index
    %c0_19 = arith.constant 0 : index
    %41 = vector.load %arg3[%c8_18, %c0_19] : memref<64x12xf32, #tpu.memory_space<vmem>>, vector<8x12xf32>
    %cst_20 = arith.constant dense<0.000000e+00> : vector<8x128xf32>
    %42 = tpu.matmul %41, %40, %cst_20 {dimension_numbers = #tpu.dot_dimension_numbers<[1], [0], [0], [1], [0, 0, 1, 1], [], []>} : vector<8x12xf32>, vector<12x128xf32>, vector<8x128xf32> -> vector<8x128xf32>
    %c64 = arith.constant 64 : index
    %c0_21 = arith.constant 0 : index
    %43 = vector.load %arg2[%c64, %c0_21] : memref<80x1xf32, #tpu.memory_space<vmem>>, vector<8x1xf32>
    %44 = vector.broadcast %43 : vector<8x1xf32> to vector<8x128xf32>
    %45 = arith.addf %42, %44 : vector<8x128xf32>
    %cst_22 = arith.constant 0.000000e+00 : f32
    %46 = vector.broadcast %cst_22 : f32 to vector<8x128xf32>
    %47 = arith.maximumf %45, %46 : vector<8x128xf32>
    %c40 = arith.constant 40 : index
    %c0_23 = arith.constant 0 : index
    %48 = vector.load %arg3[%c40, %c0_23] : memref<64x12xf32, #tpu.memory_space<vmem>>, vector<24x8xf32>
    %c72 = arith.constant 72 : index
    %c0_24 = arith.constant 0 : index
    %49 = vector.load %arg2[%c72, %c0_24] : memref<80x1xf32, #tpu.memory_space<vmem>>, vector<8x1xf32>
    %cst_25 = arith.constant dense<0.000000e+00> : vector<24x128xf32>
    %50 = tpu.matmul %48, %47, %cst_25 {dimension_numbers = #tpu.dot_dimension_numbers<[1], [0], [0], [1], [0, 0, 1, 1], [], []>} : vector<24x8xf32>, vector<8x128xf32>, vector<24x128xf32> -> vector<24x128xf32>
    %51 = vector.extract_strided_slice %50 {offsets = [0, 0], sizes = [8, 128], strides = [1, 1]} : vector<24x128xf32> to vector<8x128xf32>
    %52 = vector.extract_strided_slice %50 {offsets = [8, 0], sizes = [8, 128], strides = [1, 1]} : vector<24x128xf32> to vector<8x128xf32>
    %53 = vector.extract_strided_slice %50 {offsets = [16, 0], sizes = [8, 128], strides = [1, 1]} : vector<24x128xf32> to vector<8x128xf32>
    %cst_26 = arith.constant 0.000000e+00 : f32
    %54 = vector.broadcast %cst_26 : f32 to vector<8x1xf32>
    %55 = vector.extract_strided_slice %51 {offsets = [0, 0], sizes = [8, 127], strides = [1, 1]} : vector<8x128xf32> to vector<8x127xf32>
    %56 = tpu.concatenate %54, %55 in 1 : vector<8x1xf32>, vector<8x127xf32> -> vector<8x128xf32>
    %57 = vector.extract_strided_slice %53 {offsets = [0, 1], sizes = [8, 127], strides = [1, 1]} : vector<8x128xf32> to vector<8x127xf32>
    %58 = tpu.concatenate %57, %54 in 1 : vector<8x127xf32>, vector<8x1xf32> -> vector<8x128xf32>
    %59 = arith.addf %56, %52 : vector<8x128xf32>
    %60 = arith.addf %59, %58 : vector<8x128xf32>
    %61 = vector.broadcast %49 : vector<8x1xf32> to vector<8x128xf32>
    %62 = arith.addf %60, %61 : vector<8x128xf32>
    %63 = tpu.concatenate %32, %62 in 0 : vector<12x128xf32>, vector<8x128xf32> -> vector<20x128xf32>
    %c0_27 = arith.constant 0 : index
    %c0_28 = arith.constant 0 : index
    %c0_29 = arith.constant 0 : index
    %64 = vector.load %arg4[%c0_27, %c0_28, %c0_29] : memref<1x20x128xf32, #tpu.memory_space<vmem>>, vector<1x20x128xf32>
    %65 = vector.shape_cast %64 : vector<1x20x128xf32> to vector<20x128xf32>
    %66 = vector.shape_cast %63 : vector<20x128xf32> to vector<1x20x128xf32>
    tpu.vector_store %arg4[%c0_27, %c0_28, %c0_29], %66 {strides = array<i32>} : memref<1x20x128xf32, #tpu.memory_space<vmem>>, vector<1x20x128xf32>,
    return
  }
  func.func @transform_0(%arg0: i32) -> (i32, i32, i32) {
    %c0_i32 = arith.constant 0 : i32
    %c0_i32_0 = arith.constant 0 : i32
    %c0_i32_1 = arith.constant 0 : i32
    return %arg0, %c0_i32, %c0_i32_0 : i32, i32, i32
  }
  func.func @transform_1(%arg0: i32) -> (i32, i32) {
    %c0_i32 = arith.constant 0 : i32
    %c0_i32_0 = arith.constant 0 : i32
    %c0_i32_1 = arith.constant 0 : i32
    return %c0_i32, %c0_i32_0 : i32, i32
  }
  func.func @transform_2(%arg0: i32) -> (i32, i32) {
    %c0_i32 = arith.constant 0 : i32
    %c0_i32_0 = arith.constant 0 : i32
    %c0_i32_1 = arith.constant 0 : i32
    return %c0_i32, %c0_i32_0 : i32, i32
  }
  func.func @transform_3(%arg0: i32) -> (i32, i32, i32) {
    %c0_i32 = arith.constant 0 : i32
    %c0_i32_0 = arith.constant 0 : i32
    %c0_i32_1 = arith.constant 0 : i32
    return %arg0, %c0_i32, %c0_i32_0 : i32, i32, i32
  }
}

</mosaic_0001>

<llo_original>
// kernel: blond_dense_forward.1
$region0: #{blond_dense_forward.1}
  #allocation0 [shape = 'u32[]', space=smem, size = 0x4, offset = 0x4, fixed_abs, tag = 'smem constant byte address 0x4 - core index']
  #allocation1 [shape = 'u32[72,128]{1,0:T(1,128)}', space=vmem, size = 0x9000, scoped, tag = 'internal scratch']
  %s0 = inlined_call_operand.vmem [shape: f32[2,4,128], index: 0, kind: input, shape index: {}]
  %s1 = inlined_call_operand.vmem [shape: f32[80,1], index: 1, kind: input, shape index: {}]
  %s2 = inlined_call_operand.vmem [shape: f32[64,12], index: 2, kind: input, shape index: {}]
  %s3 = inlined_call_operand.vmem [shape: f32[2,20,128], index: 3, kind: output, shape index: {}]
  %s4 = sld [smem:[#allocation0]]
  $region45: #{blond_dense_forward.1} parent=0
    _
  %s6 = ssub.s32 1, %s4
  %s7 = scalar_select 0, %s6, %s4
  loop: start=0, step=1, limit=4
  $region2: #{blond_dense_forward.1} parent=0 // loop_pre_header
    _
  $region3: #{blond_dense_forward.1} parent=0 // loop_header
    %s9 = sphi 0, %s13
    %p10 = scmp.ge.s32.totalorder %s9, 4
    %s19 = sphi 0, %s21
    %s22 = sphi 0, %s19
    %s23 = sphi 0, %s22
    %s39 = sphi 0, %s23
    %s43 = sphi 0, %s43
    %s45 = sphi 0, %s43
    %s46 = sphi 0, %s45
    %s60 = sphi 0, %s46
    %s64 = sphi 0, %s64
    %s66 = sphi 0, %s64
    %s67 = sphi 0, %s66
    %s81 = sphi 0, %s67
    %s87 = sphi 0, %s89
    %s90 = sphi 0, %s87
    %s91 = sphi 0, %s90
    %s107 = sphi 0, %s91
  $region4: #{blond_dense_forward.1} parent=0 // loop_header_branch
    %12 = sbr.rel (%p10) target = $region8
  $region5: #{blond_dense_forward.1} parent=0 // loop_body
    %s14 = ssub.s32 %s9, 1
    %s15 = ssub.s32 %s9, 2
    %s16 = sadd.s32 %s9, 1
    %s17 = ssub.s32 %s9, %s16
    %p18 = scmp.eq.s32.totalorder %s17, 0
    %s20 = sadd.s32 %s19, 1
    %s21 = scalar_select %p18, %s19, %s20
    %p24 = pneg %p18
    %p25 = scmp.eq.s32.totalorder %s9, 1
    %p26 = por %p24, %p25
    %p27 = scmp.ne.s32.totalorder %s19, %s22
    %p28 = scmp.eq.s32.totalorder %s9, 0
    %p29 = por %p27, %p28
    %p30 = scmp.ne.s32.totalorder %s19, %s22
    %p31 = scmp.eq.s32.totalorder %s14, 1
    %p32 = por %p30, %p31
    %p33 = scmp.ne.s32.totalorder %s22, %s23
    %p34 = scmp.eq.s32.totalorder %s14, 0
    %p35 = por %p33, %p34
    %p36 = scmp.ne.s32.totalorder %s22, %s23
    %p37 = scmp.eq.s32.totalorder %s15, 1
    %p38 = por %p36, %p37
    %p40 = scmp.ne.s32.totalorder %s23, %s39
    %p41 = scmp.eq.s32.totalorder %s15, 0
    %p42 = por %p40, %p41
    %s44 = sadd.s32 %s43, 1
    %p47 = scmp.eq.s32.totalorder %s9, 1
    %p48 = scmp.ne.s32.totalorder %s43, %s45
    %p49 = scmp.eq.s32.totalorder %s9, 0
    %p50 = por %p48, %p49
    %p51 = scmp.ne.s32.totalorder %s43, %s45
    %p52 = scmp.eq.s32.totalorder %s14, 1
    %p53 = por %p51, %p52
    %p54 = scmp.ne.s32.totalorder %s45, %s46
    %p55 = scmp.eq.s32.totalorder %s14, 0
    %p56 = por %p54, %p55
    %p57 = scmp.ne.s32.totalorder %s45, %s46
    %p58 = scmp.eq.s32.totalorder %s15, 1
    %p59 = por %p57, %p58
    %p61 = scmp.ne.s32.totalorder %s46, %s60
    %p62 = scmp.eq.s32.totalorder %s15, 0
    %p63 = por %p61, %p62
    %s65 = sadd.s32 %s64, 1
    %p68 = scmp.eq.s32.totalorder %s9, 1
    %p69 = scmp.ne.s32.totalorder %s64, %s66
    %p70 = scmp.eq.s32.totalorder %s9, 0
    %p71 = por %p69, %p70
    %p72 = scmp.ne.s32.totalorder %s64, %s66
    %p73 = scmp.eq.s32.totalorder %s14, 1
    %p74 = por %p72, %p73
    %p75 = scmp.ne.s32.totalorder %s66, %s67
    %p76 = scmp.eq.s32.totalorder %s14, 0
    %p77 = por %p75, %p76
    %p78 = scmp.ne.s32.totalorder %s66, %s67
    %p79 = scmp.eq.s32.totalorder %s15, 1
    %p80 = por %p78, %p79
    %p82 = scmp.ne.s32.totalorder %s67, %s81
    %p83 = scmp.eq.s32.totalorder %s15, 0
    %p84 = por %p82, %p83
    %s85 = ssub.s32 %s9, %s16
    %p86 = scmp.eq.s32.totalorder %s85, 0
    %s88 = sadd.s32 %s87, 1
    %s89 = scalar_select %p86, %s87, %s88
    %p92 = pneg %p86
    %p93 = scmp.eq.s32.totalorder %s9, 1
    %p94 = por %p92, %p93
    %p95 = scmp.ne.s32.totalorder %s87, %s90
    %p96 = scmp.eq.s32.totalorder %s9, 0
    %p97 = por %p95, %p96
    %p98 = scmp.ne.s32.totalorder %s87, %s90
    %p99 = scmp.eq.s32.totalorder %s14, 1
    %p100 = por %p98, %p99
    %p101 = scmp.ne.s32.totalorder %s90, %s91
    %p102 = scmp.eq.s32.totalorder %s14, 0
    %p103 = por %p101, %p102
    %p104 = scmp.ne.s32.totalorder %s90, %s91
    %p105 = scmp.eq.s32.totalorder %s15, 1
    %p106 = por %p104, %p105
    %p108 = scmp.ne.s32.totalorder %s91, %s107
    %p109 = scmp.eq.s32.totalorder %s15, 0
    %p110 = por %p108, %p109
    %p111 = scmp.le.s32.totalorder 1, %s9
    %p112 = scmp.lt.s32.totalorder %s9, 3
    %p113 = pnand %p111, %p112
    %p114 = pneg %p113
    // Predicated region
    $region9: #{blond_dense_forward.1} parent=5 // pred_check
      _
    $region10: #{blond_dense_forward.1} parent=5 // pred_check_branch
      %116 = sbr.rel (%p113) target = $region12
    $region11: #{blond_dense_forward.1} parent=5 // pred_region
      %s117 = ssub.s32 %s9, 1
      // Predicated region
      $region13: #{blond_dense_forward.1} parent=11 // pred_check
        %p118 = pneg %p56
      $region14: #{blond_dense_forward.1} parent=11 // pred_check_branch
        %120 = sbr.rel (%p118) target = $region16
      $region15: #{blond_dense_forward.1} parent=11 // pred_region
        _
      $region16: #{blond_dense_forward.1} parent=11 // pred_fallthru
        _
      // Predicated region
      $region17: #{blond_dense_forward.1} parent=11 // pred_check
        %p121 = pneg %p77
      $region18: #{blond_dense_forward.1} parent=11 // pred_check_branch
        %123 = sbr.rel (%p121) target = $region20
      $region19: #{blond_dense_forward.1} parent=11 // pred_region
        _
      $region20: #{blond_dense_forward.1} parent=11 // pred_fallthru
        _
    $region12: #{blond_dense_forward.1} parent=5 // pred_fallthru
      _
    %p124 = scmp.lt.s32.totalorder %s9, 2
    // Predicated region
    $region21: #{blond_dense_forward.1} parent=5 // pred_check
      %p125 = pneg %p124
    $region22: #{blond_dense_forward.1} parent=5 // pred_check_branch
      %127 = sbr.rel (%p125) target = $region24
    $region23: #{blond_dense_forward.1} parent=5 // pred_region
      // Predicated region
      $region25: #{blond_dense_forward.1} parent=23 // pred_check
        %p128 = pneg %p29
      $region26: #{blond_dense_forward.1} parent=23 // pred_check_branch
        %130 = sbr.rel (%p128) target = $region28
      $region27: #{blond_dense_forward.1} parent=23 // pred_region
        %p131 = scmp.lt.s32.totalorder %s9, 1
        %s132 = scalar_select %p131, %s9, 1
        %s133 = smul.addr %s132, 4
        %s134 = scalar_lea.vmem %s0, %s133
      $region28: #{blond_dense_forward.1} parent=23 // pred_fallthru
        _
    $region24: #{blond_dense_forward.1} parent=5 // pred_fallthru
      _
    %p135 = scmp.le.s32.totalorder 1, %s9
    %p136 = scmp.lt.s32.totalorder %s9, 3
    %p137 = pnand %p135, %p136
    %p138 = pneg %p137
    // Predicated region
    $region29: #{blond_dense_forward.1} parent=5 // pred_check
      _
    $region30: #{blond_dense_forward.1} parent=5 // pred_check_branch
      %140 = sbr.rel (%p137) target = $region32
    $region31: #{blond_dense_forward.1} parent=5 // pred_region
      %s141 = ssub.s32 %s9, 1
      %p142 = scmp.lt.s32.totalorder %s14, 1
      %s143 = scalar_select %p142, %s14, 1
      %s144 = smul.addr %s143, 4
      %s145 = scalar_lea.vmem %s0, %s144
      %p146 = pneg %p35
      %p147 = pneg %p32
      %p148 = pneg %p56
      %p149 = pneg %p53
      %p150 = pneg %p77
      %p151 = pneg %p74
      %p152 = pneg %p103
      %p153 = pneg %p100
      %p154 = scmp.lt.s32.totalorder %s14, 1
      %s155 = scalar_select %p154, %s14, 1
      %s156 = smul.addr %s155, 3
      %s157 = smul.addr %s156, 8
      %s158 = scalar_lea.vmem %s3, %s157
      %p159 = scmp.lt.s32.totalorder %s14, 1
      %s160 = scalar_select %p159, %s14, 1
      %s161 = smul.addr %s160, 4
      %s162 = scalar_lea.vmem %s0, %s161
      %p163 = scmp.lt.s32.totalorder %s14, 1
      %s164 = scalar_select %p163, %s14, 1
      %s165 = smul.addr %s164, 3
      %s166 = smul.addr %s165, 8
      %s167 = scalar_lea.vmem %s3, %s166
      %v168 = vld [vmem:[%s162] sm:$0xf]
      %v169 = vld [vmem:[%s1] sm:$0xf]
      %171 = vset.pattern.permute.xlu0 0
      %172 = vperm.xlu0 %171, %v169
      %v173 = vpop.permute.xlu0 %172
      %v175 = vmul.f32 %v168, %v173
      %v176 = vld [vmem:[%s1 + $0x8] sm:$0xf]
      %178 = vset.pattern.permute.xlu0 0
      %179 = vperm.xlu0 %178, %v176
      %v180 = vpop.permute.xlu0 %179
      %v182 = vadd.f32 %v175, %v180
      %v183 = vmax.f32 %v182, 0.0
      %v184 = vld [vmem:[%s2] sm:$0xff]
      %v185 = vld [vmem:[%s1 + $0x10] sm:$0xff]
      %187 = vset.pattern.permute.xlu0 0
      %188 = vperm.xlu0 %187, %v185
      %v189 = vpop.permute.xlu0 %188
      %vm191 = vcmask 31744
      %v193 = vsel %vm191, %v184, 0
      %vm195 = vcmask 1043456
      %v197 = vsel %vm195, %v183, 0
      %199 = vmatpush.msra.mxu0 0.0
      %200 = vmatpush.msra.mxu0 0.0
      %201 = vmatpush.msra.mxu0 0.0
      %202 = vmatpush.msra.mxu0 0.0
      %203 = vmatpush.msra.mxu0 0.0
      %204 = vmatpush.msra.mxu0 0.0
      %205 = vmatpush.msra.mxu0 0.0
      %206 = vmatpush.msra.mxu0 0.0
      %207 = vmatpush.msra.mxu0 0.0
      %208 = vmatpush.msra.mxu0 0.0
      %209 = vmatpush.msra.mxu0 0.0
      %210 = vmatpush.msra.mxu0 0.0
      %211 = vmatpush.msra.mxu0 0.0
      %212 = vmatpush.msra.mxu0 0.0
      %213 = vmatpush.msra.mxu0 0.0
      %214 = vmatpush.msra.mxu0 %v197
      %215 = vmatmul.f32.gmra.mxu0 %v193
      %v216 = vpop.f32.mrf.mxu0
      %v217 = vadd.f32 %v189, %v216
      %218 = vdwg.mxu0
      %v219 = vmax.f32 %v217, 0.0
      %v220 = vld [vmem:[%s2 + $0x10] sm:$0xff]
      %v221 = vld [vmem:[%s2 + $0x18] sm:$0xff]
      %v222 = vld [vmem:[%s2 + $0x20] sm:$0xff]
      %v223 = vld [vmem:[%s1 + $0x18] sm:$0xff]
      %vm224 = vcmask 64512
      %v226 = vsel %vm224, %v220, 0
      %v229 = vsel %vm224, %v221, 0
      %v232 = vsel %vm224, %v222, 0
      %234 = vmatpush.msra.mxu0 0.0
      %235 = vmatpush.msra.mxu0 0.0
      %236 = vmatpush.msra.mxu0 0.0
      %237 = vmatpush.msra.mxu0 0.0
      %238 = vmatpush.msra.mxu0 0.0
      %239 = vmatpush.msra.mxu0 0.0
      %240 = vmatpush.msra.mxu0 0.0
      %241 = vmatpush.msra.mxu0 0.0
      %242 = vmatpush.msra.mxu0 0.0
      %243 = vmatpush.msra.mxu0 0.0
      %244 = vmatpush.msra.mxu0 0.0
      %245 = vmatpush.msra.mxu0 0.0
      %246 = vmatpush.msra.mxu0 0.0
      %247 = vmatpush.msra.mxu0 0.0
      %248 = vmatpush.msra.mxu0 0.0
      %249 = vmatpush.msra.mxu0 %v219
      %250 = vmatmul.f32.gmra.mxu0 %v226
      %v251 = vpop.f32.mrf.mxu0
      %v252 = vadd.f32 0.0, %v251
      %253 = vmatmul.f32.gmra.mxu0 %v229
      %v254 = vpop.f32.mrf.mxu0
      %v255 = vadd.f32 0.0, %v254
      %256 = vmatmul.f32.gmra.mxu0 %v232
      %v257 = vpop.f32.mrf.mxu0
      %v258 = vadd.f32 0.0, %v257
      %259 = vdwg.mxu0
      %261 = vrot.lane.b32.xlu0 %v252, 1
      %v262 = vpop.permute.xlu0 %261
      %vm264 = vcmask 7168
      %v265 = vsel %vm264, 0.0, %v262
      %267 = vrot.lane.b32.xlu0 %v258, 127
      %v268 = vpop.permute.xlu0 %267
      %vm270 = vcmask 1039360
      %v271 = vsel %vm270, %v268, 0.0
      %v272 = vadd.f32 %v265, %v255
      %v273 = vadd.f32 %v272, %v271
      %275 = vset.pattern.permute.xlu0 0
      %276 = vperm.xlu0 %275, %v223
      %v277 = vpop.permute.xlu0 %276
      %v279 = vadd.f32 %v273, %v277
      %v281 = vrot.slane %v279, 4
      %v283 = vsel %vm195, %v168, %v281
      %v284 = vld [vmem:[%s1 + $0x20] sm:$0xff]
      %v285 = vld [vmem:[%s1 + $0x28] sm:$0xf]
      %287 = vset.pattern.permute.xlu0 0
      %288 = vperm.xlu0 %287, %v284
      %v289 = vpop.permute.xlu0 %288
      %292 = vset.pattern.permute.xlu0 0
      %293 = vperm.xlu0 %292, %v285
      %v294 = vpop.permute.xlu0 %293
      %v296 = vmul.f32 %v283, %v289
      %v297 = vmul.f32 %v281, %v294
      %v298 = vld [vmem:[%s1 + $0x30] sm:$0xff]
      %v299 = vld [vmem:[%s1 + $0x38] sm:$0xf]
      %301 = vset.pattern.permute.xlu0 0
      %302 = vperm.xlu0 %301, %v298
      %v303 = vpop.permute.xlu0 %302
      %306 = vset.pattern.permute.xlu0 0
      %307 = vperm.xlu0 %306, %v299
      %v308 = vpop.permute.xlu0 %307
      %v310 = vadd.f32 %v296, %v303
      %v311 = vadd.f32 %v297, %v308
      %v312 = vmax.f32 %v310, 0.0
      %v313 = vmax.f32 %v311, 0.0
      %v314 = vld [vmem:[%s2 + $0x8] sm:$0xff]
      %v315 = vld [vmem:[%s1 + $0x40] sm:$0xff]
      %317 = vset.pattern.permute.xlu0 0
      %318 = vperm.xlu0 %317, %v315
      %v319 = vpop.permute.xlu0 %318
      %vm321 = vcmask 97280
      %v323 = vsel %vm321, %v314, 0
      %v326 = vsel %vm195, %v313, 0
      %328 = vmatpush.msra.mxu0 0.0
      %329 = vmatpush.msra.mxu0 0.0
      %330 = vmatpush.msra.mxu0 0.0
      %331 = vmatpush.msra.mxu0 0.0
      %332 = vmatpush.msra.mxu0 0.0
      %333 = vmatpush.msra.mxu0 0.0
      %334 = vmatpush.msra.mxu0 0.0
      %335 = vmatpush.msra.mxu0 0.0
      %336 = vmatpush.msra.mxu0 0.0
      %337 = vmatpush.msra.mxu0 0.0
      %338 = vmatpush.msra.mxu0 0.0
      %339 = vmatpush.msra.mxu0 0.0
      %340 = vmatpush.msra.mxu0 0.0
      %341 = vmatpush.msra.mxu0 0.0
      %342 = vmatpush.msra.mxu0 %v326
      %343 = vmatpush.msra.mxu0 %v312
      %344 = vmatmul.f32.gmra.mxu0 %v323
      %v345 = vpop.f32.mrf.mxu0
      %v346 = vadd.f32 %v319, %v345
      %347 = vdwg.mxu0
      %v348 = vmax.f32 %v346, 0.0
      %v349 = vld [vmem:[%s2 + $0x28] sm:$0xff]
      %v350 = vld [vmem:[%s2 + $0x30] sm:$0xff]
      %v351 = vld [vmem:[%s2 + $0x38] sm:$0xff]
      %v352 = vld [vmem:[%s1 + $0x48] sm:$0xff]
      %v354 = vsel %vm224, %v349, 0
      %v357 = vsel %vm224, %v350, 0
      %v360 = vsel %vm224, %v351, 0
      %362 = vmatpush.msra.mxu0 0.0
      %363 = vmatpush.msra.mxu0 0.0
      %364 = vmatpush.msra.mxu0 0.0
      %365 = vmatpush.msra.mxu0 0.0
      %366 = vmatpush.msra.mxu0 0.0
      %367 = vmatpush.msra.mxu0 0.0
      %368 = vmatpush.msra.mxu0 0.0
      %369 = vmatpush.msra.mxu0 0.0
      %370 = vmatpush.msra.mxu0 0.0
      %371 = vmatpush.msra.mxu0 0.0
      %372 = vmatpush.msra.mxu0 0.0
      %373 = vmatpush.msra.mxu0 0.0
      %374 = vmatpush.msra.mxu0 0.0
      %375 = vmatpush.msra.mxu0 0.0
      %376 = vmatpush.msra.mxu0 0.0
      %377 = vmatpush.msra.mxu0 %v348
      %378 = vmatmul.f32.gmra.mxu0 %v354
      %v379 = vpop.f32.mrf.mxu0
      %v380 = vadd.f32 0.0, %v379
      %381 = vmatmul.f32.gmra.mxu0 %v357
      %v382 = vpop.f32.mrf.mxu0
      %v383 = vadd.f32 0.0, %v382
      %384 = vmatmul.f32.gmra.mxu0 %v360
      %v385 = vpop.f32.mrf.mxu0
      %v386 = vadd.f32 0.0, %v385
      %387 = vdwg.mxu0
      %389 = vrot.lane.b32.xlu0 %v380, 1
      %v390 = vpop.permute.xlu0 %389
      %v392 = vsel %vm264, 0.0, %v390
      %394 = vrot.lane.b32.xlu0 %v386, 127
      %v395 = vpop.permute.xlu0 %394
      %v397 = vsel %vm270, %v395, 0.0
      %v398 = vadd.f32 %v392, %v383
      %v399 = vadd.f32 %v398, %v397
      %401 = vset.pattern.permute.xlu0 0
      %402 = vperm.xlu0 %401, %v352
      %v403 = vpop.permute.xlu0 %402
      %v405 = vadd.f32 %v399, %v403
      %v407 = vrot.slane %v405, 4
      %v409 = vsel %vm195, %v281, %v407
      %410 = vst [vmem:[%s167] sm:$0xff] %v283
      %411 = vst [vmem:[%s167 + $0x8] sm:$0xff] %v409
      %412 = vst [vmem:[%s167 + $0x10] sm:$0xf] %v407
      %p413 = scmp.lt.s32.totalorder %s14, 1
      %s414 = scalar_select %p413, %s14, 1
      %s415 = smul.addr %s414, 3
      %s416 = smul.addr %s415, 8
      %s417 = scalar_lea.vmem %s3, %s416
      // Predicated region
      $region33: #{blond_dense_forward.1} parent=31 // pred_check
        %p418 = pneg %p100
      $region34: #{blond_dense_forward.1} parent=31 // pred_check_branch
        %420 = sbr.rel (%p418) target = $region36
      $region35: #{blond_dense_forward.1} parent=31 // pred_region
        _
      $region36: #{blond_dense_forward.1} parent=31 // pred_fallthru
        _
    $region32: #{blond_dense_forward.1} parent=5 // pred_fallthru
      _
    %p421 = scmp.le.s32.totalorder 2, %s9
    // Predicated region
    $region37: #{blond_dense_forward.1} parent=5 // pred_check
      %p422 = pneg %p421
    $region38: #{blond_dense_forward.1} parent=5 // pred_check_branch
      %424 = sbr.rel (%p422) target = $region40
    $region39: #{blond_dense_forward.1} parent=5 // pred_region
      %s425 = ssub.s32 %s9, 2
      // Predicated region
      $region41: #{blond_dense_forward.1} parent=39 // pred_check
        %p426 = pneg %p106
      $region42: #{blond_dense_forward.1} parent=39 // pred_check_branch
        %428 = sbr.rel (%p426) target = $region44
      $region43: #{blond_dense_forward.1} parent=39 // pred_region
        %p429 = scmp.lt.s32.totalorder %s15, 1
        %s430 = scalar_select %p429, %s15, 1
        %s431 = smul.addr %s430, 3
        %s432 = smul.addr %s431, 8
        %s433 = scalar_lea.vmem %s3, %s432
      $region44: #{blond_dense_forward.1} parent=39 // pred_fallthru
        _
    $region40: #{blond_dense_forward.1} parent=5 // pred_fallthru
      _
  $region6: #{blond_dense_forward.1} parent=0 // loop_footer
    %s13 = sadd.s32 1, %s9
  $region7: #{blond_dense_forward.1} parent=0 // loop_footer_branch
    %8 = sbr.rel target = $region3
  $region8: #{blond_dense_forward.1} parent=0 // loop_exit
    _

</llo_original>
